<compile_context>
chip_gen: v5e
topology: v5e:2x2
jax: 0.10.0
libtpu: 0.0.40
codegen_flags: <defaults>
</compile_context>

<pallas_src>
import functools

import jax
import jax.numpy as jnp
from jax import lax
from jax.experimental import pallas as pl
from jax.experimental.pallas import tpu as pltpu

_NUM_CORES = 2      # leading "parallel" axis (v7x has 2 TCs; harmless elsewhere)
_SUBLANE = 8
_LANE = 128


def _sc_loss_kernel(x_ref, y_ref, o_ref, dacc_ref, yacc_ref, *,
                    n_rows, n_cols, tile_rows, steps_per_core, n_blocks,
                    need_mask):
    c = pl.program_id(0)            # parallel (core) axis
    s = pl.program_id(1)            # reduction axis (row-blocks per core)

    @pl.when(s == 0)
    def _():
        dacc_ref[...] = jnp.zeros_like(dacc_ref)
        yacc_ref[...] = jnp.zeros_like(yacc_ref)

    # widen in-vreg; all per-element work is pure VPU
    x = x_ref[...].astype(jnp.float32)
    y = y_ref[...].astype(jnp.float32)
    d = y - x
    dsq = d * d
    ysq = y * y

    def _accumulate(dv, yv):
        # fold the block's rows into the tiny (1, C) accumulators; the
        # cross-sublane reduce lands on the otherwise idle XLU slot.
        dacc_ref[...] += jnp.sum(dv, axis=0, keepdims=True)
        yacc_ref[...] += jnp.sum(yv, axis=0, keepdims=True)

    if need_mask:
        blk = c * steps_per_core + s            # intended (unclamped) block idx

        @pl.when(blk < n_blocks - 1)            # interior blocks: no mask cost
        def _():
            _accumulate(dsq, ysq)

        @pl.when(blk >= n_blocks - 1)           # last real block + duplicates
        def _():
            row0 = blk * tile_rows
            rows = lax.broadcasted_iota(jnp.int32, (tile_rows, n_cols), 0) + row0
            valid = rows < n_rows
            _accumulate(jnp.where(valid, dsq, 0.0), jnp.where(valid, ysq, 0.0))
    else:
        _accumulate(dsq, ysq)

    @pl.when(s == steps_per_core - 1)
    def _():
        dsum = jnp.sum(dacc_ref[...])
        ysum = jnp.sum(yacc_ref[...])
        r = lax.broadcasted_iota(jnp.int32, (_SUBLANE, _LANE), 0)
        # per-core partials: row 0 = sum((y-x)^2), row 1 = sum(y^2)
        o_ref[...] = jnp.where(r == 0, dsum, jnp.where(r == 1, ysum, 0.0))


def _flatten_lane_dense(a):
    """Free (metadata-only) reshape to a lane-dense 2D layout when possible."""
    n = a.size
    for cw in (1024, 512, 256, 128):
        if n % cw == 0:
            return a.reshape(n // cw, cw)
    return a.reshape(-1, a.shape[-1])       # fallback: full-F rows (contiguous)


def spectral_convergence_loss(x_mag, y_mag):
    assert x_mag.shape == y_mag.shape
    assert x_mag.dtype == y_mag.dtype

    x2 = _flatten_lane_dense(x_mag)
    y2 = _flatten_lane_dense(y_mag)
    R, C = x2.shape
    itemsize = x2.dtype.itemsize

    # ~4 MiB per input block (in native dtype); 2 inputs x 2 buffers = 16 MiB
    # resident, which together with f32 intermediates stays well under the
    # 48 MiB VMEM limit below (safe on v7x's 64 MiB, ample on v5e/v6e 128 MiB).
    target_block_bytes = 4 * 1024 * 1024
    budget_rows = max(_SUBLANE,
                      (target_block_bytes // max(1, C * itemsize))
                      // _SUBLANE * _SUBLANE)
    # keep both cores busy when the array is smaller than 2 full-budget blocks
    rows_per_core = -(-R // _NUM_CORES)
    rows_per_core = -(-rows_per_core // _SUBLANE) * _SUBLANE
    tile_rows = max(_SUBLANE, min(budget_rows, rows_per_core))
    if tile_rows >= R:
        tile_rows = R                       # single full-extent block

    n_blocks = pl.cdiv(R, tile_rows)
    steps_per_core = pl.cdiv(n_blocks, _NUM_CORES)
    need_mask = (_NUM_CORES * steps_per_core * tile_rows) != R

    kernel = functools.partial(
        _sc_loss_kernel, n_rows=R, n_cols=C, tile_rows=tile_rows,
        steps_per_core=steps_per_core, n_blocks=n_blocks, need_mask=need_mask)

    # clamp duplicated tail block indices so every DMA window starts in-bounds;
    # their contribution is zeroed by the in-kernel row mask.
    def in_map(c, s):
        return (jnp.minimum(c * steps_per_core + s, n_blocks - 1), 0)

    n_elems = x_mag.size
    cost = pl.CostEstimate(
        flops=5 * n_elems,
        transcendentals=0,
        bytes_accessed=2 * n_elems * itemsize + _NUM_CORES * _SUBLANE * _LANE * 4)

    out = pl.pallas_call(
        kernel,
        out_shape=jax.ShapeDtypeStruct((_NUM_CORES * _SUBLANE, _LANE),
                                       jnp.float32),
        grid_spec=pltpu.PrefetchScalarGridSpec(
            num_scalar_prefetch=0,
            grid=(_NUM_CORES, steps_per_core),
            in_specs=[pl.BlockSpec((tile_rows, C), in_map),
                      pl.BlockSpec((tile_rows, C), in_map)],
            out_specs=pl.BlockSpec((_SUBLANE, _LANE), lambda c, s: (c, 0)),
            scratch_shapes=[pltpu.VMEM((1, C), jnp.float32),
                            pltpu.VMEM((1, C), jnp.float32)],
        ),
        compiler_params=pltpu.CompilerParams(
            dimension_semantics=("parallel", "arbitrary"),
            vmem_limit_bytes=48 * 1024 * 1024,
        ),
        cost_estimate=cost,
    )(x2, y2)

    parts = out.reshape(_NUM_CORES, _SUBLANE, _LANE)
    dsum = parts[:, 0, 0].sum()
    ysum = parts[:, 1, 0].sum()
    # NOTE: all-zero y_mag yields NaN/Inf, matching the torch reference.
    return jnp.sqrt(dsum / ysum)


if __name__ == "__main__":
    key = jax.random.PRNGKey(0)
    kx, ky = jax.random.split(key)
    B, T, F = 2, 8, 80  # (batch, #frames, #freq_bins)
    # magnitude spectrograms are non-negative
    x_mag = jnp.abs(jax.random.normal(kx, (B, T, F), dtype=jnp.float32))
    y_mag = jnp.abs(jax.random.normal(ky, (B, T, F), dtype=jnp.float32))

    loss = spectral_convergence_loss(x_mag, y_mag)
    loss = jax.block_until_ready(loss)

    # reference check in plain JAX
    ref = jnp.linalg.norm(y_mag - x_mag) / jnp.linalg.norm(y_mag)
    assert jnp.allclose(loss, ref, rtol=1e-5, atol=1e-6), (loss, ref)

    print("KERNEL_OK")
</pallas_src>

<mosaic_0001>
module attributes {stable_mosaic.version = 11 : i64} {
  func.func @_sc_loss_kernel(%arg0: i32, %arg1: i32, %arg2: memref<5x256xf32, #tpu.memory_space<vmem>>, %arg3: memref<5x256xf32, #tpu.memory_space<vmem>>, %arg4: memref<8x128xf32, #tpu.memory_space<vmem>>, %arg5: memref<1x256xf32, #tpu.memory_space<vmem>>, %arg6: memref<1x256xf32, #tpu.memory_space<vmem>>) attributes {dimension_semantics = [#tpu.dimension_semantics<parallel>, #tpu.dimension_semantics<arbitrary>], iteration_bounds = array<i64: 2, 1>, scalar_prefetch = 0 : i64, scratch_operands = 2 : i64, tpu.core_type = #tpu.core_type<tc>, window_params = [{transform_indices = @transform_0, window_bounds = array<i64: 5, 256>}, {transform_indices = @transform_1, window_bounds = array<i64: 5, 256>}, {transform_indices = @transform_2, window_bounds = array<i64: 8, 128>}]} {
    %c0_i32 = arith.constant 0 : i32
    %0 = arith.cmpi eq, %arg1, %c0_i32 : i32
    %1 = arith.extui %0 : i1 to i32
    %c0_i32_0 = arith.constant 0 : i32
    %2 = arith.cmpi ne, %1, %c0_i32_0 : i32
    scf.if %2 {
      %cst = arith.constant 0.000000e+00 : f32
      %19 = vector.broadcast %cst : f32 to vector<1x256xf32>
      %c0_10 = arith.constant 0 : index
      %c0_11 = arith.constant 0 : index
      %20 = vector.load %arg5[%c0_10, %c0_11] : memref<1x256xf32, #tpu.memory_space<vmem>>, vector<1x256xf32>
      tpu.vector_store %arg5[%c0_10, %c0_11], %19 {strides = array<i32>} : memref<1x256xf32, #tpu.memory_space<vmem>>, vector<1x256xf32>,
      %cst_12 = arith.constant 0.000000e+00 : f32
      %21 = vector.broadcast %cst_12 : f32 to vector<1x256xf32>
      %c0_13 = arith.constant 0 : index
      %c0_14 = arith.constant 0 : index
      %22 = vector.load %arg6[%c0_13, %c0_14] : memref<1x256xf32, #tpu.memory_space<vmem>>, vector<1x256xf32>
      tpu.vector_store %arg6[%c0_13, %c0_14], %21 {strides = array<i32>} : memref<1x256xf32, #tpu.memory_space<vmem>>, vector<1x256xf32>,
    } else {
    }
    %c0 = arith.constant 0 : index
    %c0_1 = arith.constant 0 : index
    %3 = vector.load %arg2[%c0, %c0_1] : memref<5x256xf32, #tpu.memory_space<vmem>>, vector<5x256xf32>
    %c0_2 = arith.constant 0 : index
    %c0_3 = arith.constant 0 : index
    %4 = vector.load %arg3[%c0_2, %c0_3] : memref<5x256xf32, #tpu.memory_space<vmem>>, vector<5x256xf32>
    %5 = arith.subf %4, %3 : vector<5x256xf32>
    %6 = arith.mulf %5, %5 : vector<5x256xf32>
    %7 = arith.mulf %4, %4 : vector<5x256xf32>
    %c1_i32 = arith.constant 1 : i32
    %8 = arith.muli %arg0, %c1_i32 : i32
    %9 = arith.addi %8, %arg1 : i32
    %c0_i32_4 = arith.constant 0 : i32
    %10 = arith.cmpi slt, %9, %c0_i32_4 : i32
    %11 = arith.extui %10 : i1 to i32
    %c0_i32_5 = arith.constant 0 : i32
    %12 = arith.cmpi ne, %11, %c0_i32_5 : i32
    scf.if %12 {
      %c0_10 = arith.constant 0 : index
      %c0_11 = arith.constant 0 : index
      %19 = vector.load %arg5[%c0_10, %c0_11] : memref<1x256xf32, #tpu.memory_space<vmem>>, vector<1x256xf32>
      %cst = arith.constant dense<0.000000e+00> : vector<256xf32>
      %20 = vector.multi_reduction <add>, %6, %cst [0] : vector<5x256xf32> to vector<256xf32>
      %21 = vector.shape_cast %20 : vector<256xf32> to vector<1x256xf32>
      %22 = arith.addf %19, %21 : vector<1x256xf32>
      %c0_12 = arith.constant 0 : index
      %c0_13 = arith.constant 0 : index
      %23 = vector.load %arg5[%c0_12, %c0_13] : memref<1x256xf32, #tpu.memory_space<vmem>>, vector<1x256xf32>
      tpu.vector_store %arg5[%c0_12, %c0_13], %22 {strides = array<i32>} : memref<1x256xf32, #tpu.memory_space<vmem>>, vector<1x256xf32>,
      %c0_14 = arith.constant 0 : index
      %c0_15 = arith.constant 0 : index
      %24 = vector.load %arg6[%c0_14, %c0_15] : memref<1x256xf32, #tpu.memory_space<vmem>>, vector<1x256xf32>
      %cst_16 = arith.constant dense<0.000000e+00> : vector<256xf32>
      %25 = vector.multi_reduction <add>, %7, %cst_16 [0] : vector<5x256xf32> to vector<256xf32>
      %26 = vector.shape_cast %25 : vector<256xf32> to vector<1x256xf32>
      %27 = arith.addf %24, %26 : vector<1x256xf32>
      %c0_17 = arith.constant 0 : index
      %c0_18 = arith.constant 0 : index
      %28 = vector.load %arg6[%c0_17, %c0_18] : memref<1x256xf32, #tpu.memory_space<vmem>>, vector<1x256xf32>
      tpu.vector_store %arg6[%c0_17, %c0_18], %27 {strides = array<i32>} : memref<1x256xf32, #tpu.memory_space<vmem>>, vector<1x256xf32>,
    } else {
    }
    %c0_i32_6 = arith.constant 0 : i32
    %13 = arith.cmpi sge, %9, %c0_i32_6 : i32
    %14 = arith.extui %13 : i1 to i32
    %c0_i32_7 = arith.constant 0 : i32
    %15 = arith.cmpi ne, %14, %c0_i32_7 : i32
    scf.if %15 {
      %c5_i32 = arith.constant 5 : i32
      %19 = arith.muli %9, %c5_i32 : i32
      %20 = tpu.iota {dimensions = array<i32: 0>} : vector<5x256xi32>
      %21 = vector.broadcast %19 : i32 to vector<5x256xi32>
      %22 = arith.addi %20, %21 : vector<5x256xi32>
      %c5_i32_10 = arith.constant 5 : i32
      %23 = vector.broadcast %c5_i32_10 : i32 to vector<5x256xi32>
      %24 = arith.cmpi slt, %22, %23 : vector<5x256xi32>
      %cst = arith.constant 0.000000e+00 : f32
      %25 = vector.broadcast %cst : f32 to vector<5x256xf32>
      %26 = arith.select %24, %6, %25 : vector<5x256xi1>, vector<5x256xf32>
      %cst_11 = arith.constant 0.000000e+00 : f32
      %27 = vector.broadcast %cst_11 : f32 to vector<5x256xf32>
      %28 = arith.select %24, %7, %27 : vector<5x256xi1>, vector<5x256xf32>
      %c0_12 = arith.constant 0 : index
      %c0_13 = arith.constant 0 : index
      %29 = vector.load %arg5[%c0_12, %c0_13] : memref<1x256xf32, #tpu.memory_space<vmem>>, vector<1x256xf32>
      %cst_14 = arith.constant dense<0.000000e+00> : vector<256xf32>
      %30 = vector.multi_reduction <add>, %26, %cst_14 [0] : vector<5x256xf32> to vector<256xf32>
      %31 = vector.shape_cast %30 : vector<256xf32> to vector<1x256xf32>
      %32 = arith.addf %29, %31 : vector<1x256xf32>
      %c0_15 = arith.constant 0 : index
      %c0_16 = arith.constant 0 : index
      %33 = vector.load %arg5[%c0_15, %c0_16] : memref<1x256xf32, #tpu.memory_space<vmem>>, vector<1x256xf32>
      tpu.vector_store %arg5[%c0_15, %c0_16], %32 {strides = array<i32>} : memref<1x256xf32, #tpu.memory_space<vmem>>, vector<1x256xf32>,
      %c0_17 = arith.constant 0 : index
      %c0_18 = arith.constant 0 : index
      %34 = vector.load %arg6[%c0_17, %c0_18] : memref<1x256xf32, #tpu.memory_space<vmem>>, vector<1x256xf32>
      %cst_19 = arith.constant dense<0.000000e+00> : vector<256xf32>
      %35 = vector.multi_reduction <add>, %28, %cst_19 [0] : vector<5x256xf32> to vector<256xf32>
      %36 = vector.shape_cast %35 : vector<256xf32> to vector<1x256xf32>
      %37 = arith.addf %34, %36 : vector<1x256xf32>
      %c0_20 = arith.constant 0 : index
      %c0_21 = arith.constant 0 : index
      %38 = vector.load %arg6[%c0_20, %c0_21] : memref<1x256xf32, #tpu.memory_space<vmem>>, vector<1x256xf32>
      tpu.vector_store %arg6[%c0_20, %c0_21], %37 {strides = array<i32>} : memref<1x256xf32, #tpu.memory_space<vmem>>, vector<1x256xf32>,
    } else {
    }
    %c0_i32_8 = arith.constant 0 : i32
    %16 = arith.cmpi eq, %arg1, %c0_i32_8 : i32
    %17 = arith.extui %16 : i1 to i32
    %c0_i32_9 = arith.constant 0 : i32
    %18 = arith.cmpi ne, %17, %c0_i32_9 : i32
    scf.if %18 {
      %c0_10 = arith.constant 0 : index
      %c0_11 = arith.constant 0 : index
      %19 = vector.load %arg5[%c0_10, %c0_11] : memref<1x256xf32, #tpu.memory_space<vmem>>, vector<1x256xf32>
      %20 = vector.shape_cast %19 : vector<1x256xf32> to vector<1x1x256xf32>
      %cst = arith.constant dense<0.000000e+00> : vector<1xf32>
      %21 = vector.multi_reduction <add>, %20, %cst [1, 2] : vector<1x1x256xf32> to vector<1xf32>
      %22 = vector.shape_cast %21 : vector<1xf32> to vector<1x1x1xf32>
      %23 = vector.extract %22[0, 0, 0] : f32 from vector<1x1x1xf32>
      %c0_12 = arith.constant 0 : index
      %c0_13 = arith.constant 0 : index
      %24 = vector.load %arg6[%c0_12, %c0_13] : memref<1x256xf32, #tpu.memory_space<vmem>>, vector<1x256xf32>
      %25 = vector.shape_cast %24 : vector<1x256xf32> to vector<1x1x256xf32>
      %cst_14 = arith.constant dense<0.000000e+00> : vector<1xf32>
      %26 = vector.multi_reduction <add>, %25, %cst_14 [1, 2] : vector<1x1x256xf32> to vector<1xf32>
      %27 = vector.shape_cast %26 : vector<1xf32> to vector<1x1x1xf32>
      %28 = vector.extract %27[0, 0, 0] : f32 from vector<1x1x1xf32>
      %29 = tpu.iota {dimensions = array<i32: 0>} : vector<8x128xi32>
      %c0_i32_15 = arith.constant 0 : i32
      %30 = vector.broadcast %c0_i32_15 : i32 to vector<8x128xi32>
      %31 = arith.cmpi eq, %29, %30 : vector<8x128xi32>
      %c1_i32_16 = arith.constant 1 : i32
      %32 = vector.broadcast %c1_i32_16 : i32 to vector<8x128xi32>
      %33 = arith.cmpi eq, %29, %32 : vector<8x128xi32>
      %cst_17 = arith.constant 0.000000e+00 : f32
      %34 = vector.broadcast %28 : f32 to vector<8x128xf32>
      %35 = vector.broadcast %cst_17 : f32 to vector<8x128xf32>
      %36 = arith.select %33, %34, %35 : vector<8x128xi1>, vector<8x128xf32>
      %37 = vector.broadcast %23 : f32 to vector<8x128xf32>
      %38 = arith.select %31, %37, %36 : vector<8x128xi1>, vector<8x128xf32>
      %c0_18 = arith.constant 0 : index
      %c0_19 = arith.constant 0 : index
      %39 = vector.load %arg4[%c0_18, %c0_19] : memref<8x128xf32, #tpu.memory_space<vmem>>, vector<8x128xf32>
      tpu.vector_store %arg4[%c0_18, %c0_19], %38 {strides = array<i32>} : memref<8x128xf32, #tpu.memory_space<vmem>>, vector<8x128xf32>,
    } else {
    }
    return
  }
  func.func @transform_0(%arg0: i32, %arg1: i32) -> (i32, i32) {
    %c1_i32 = arith.constant 1 : i32
    %0 = arith.muli %arg0, %c1_i32 : i32
    %1 = arith.addi %0, %arg1 : i32
    %c0_i32 = arith.constant 0 : i32
    %2 = arith.minsi %1, %c0_i32 : i32
    %c0_i32_0 = arith.constant 0 : i32
    %c0_i32_1 = arith.constant 0 : i32
    return %2, %c0_i32_0 : i32, i32
  }
  func.func @transform_1(%arg0: i32, %arg1: i32) -> (i32, i32) {
    %c1_i32 = arith.constant 1 : i32
    %0 = arith.muli %arg0, %c1_i32 : i32
    %1 = arith.addi %0, %arg1 : i32
    %c0_i32 = arith.constant 0 : i32
    %2 = arith.minsi %1, %c0_i32 : i32
    %c0_i32_0 = arith.constant 0 : i32
    %c0_i32_1 = arith.constant 0 : i32
    return %2, %c0_i32_0 : i32, i32
  }
  func.func @transform_2(%arg0: i32, %arg1: i32) -> (i32, i32) {
    %c0_i32 = arith.constant 0 : i32
    %c0_i32_0 = arith.constant 0 : i32
    return %arg0, %c0_i32 : i32, i32
  }
}

</mosaic_0001>

<llo_original>
// kernel: tpu_custom_call.1
$region0: #{tpu_custom_call.1}
  #allocation0 [shape = 'u32[]', space=smem, size = 0x4, offset = 0x4, fixed_abs, tag = 'smem constant byte address 0x4 - core index']
  #allocation1 [shape = 'u32[72,128]{1,0:T(1,128)}', space=vmem, size = 0x9000, scoped, tag = 'internal scratch']
  #allocation2 [shape = 'f32[1,256]{1,0:T(1,128)}', space=vmem, size = 0x400, scoped, tag = 'scratch operand']
  #allocation3 [shape = 'f32[1,256]{1,0:T(1,128)}', space=vmem, size = 0x400, scoped, tag = 'scratch operand']
  %s0 = inlined_call_operand.hbm [shape: f32[5,256], index: 0, kind: input, shape index: {}]
  %s1 = inlined_call_operand.hbm [shape: f32[5,256], index: 1, kind: input, shape index: {}]
  %s2 = inlined_call_operand.hbm [shape: f32[16,128], index: 2, kind: output, shape index: {}]
  %s3 = sld [smem:[#allocation0]]
  $region65: #{tpu_custom_call.1} parent=0
    _
  %s5 = ssub.s32 1, %s3
  %s6 = scalar_select 0, %s5, %s3
  $region1: #{tpu_custom_call.1} parent=0
    #allocation4 [shape = 'u8[16384]{0}', space=vmem, size = 0x4000, scoped, tag = 'input window, operand 0']
    #allocation5 [shape = 's32[2]{0}', space=sflag, size = 0x8, scoped, tag = 'scoped memory for tpu_custom_call.1']
    #allocation6 [shape = 's32[2]{0}', space=sflag, size = 0x8, scoped, tag = 'scoped memory for tpu_custom_call.1']
    #allocation7 [shape = 'u8[16384]{0}', space=vmem, size = 0x4000, scoped, tag = 'input window, operand 1']
    #allocation8 [shape = 's32[2]{0}', space=sflag, size = 0x8, scoped, tag = 'scoped memory for tpu_custom_call.1']
    #allocation9 [shape = 'u8[8192]{0}', space=vmem, size = 0x2000, scoped, tag = 'output window, operand 0']
    %7 = vsyncpa [#allocation5], 0
    %s8 = scalar_lea.sflag [#allocation5], 1
    %9 = vsyncpa %s8, 0
    %10 = vsyncpa [#allocation8], 0
    %s11 = scalar_lea.sflag [#allocation8], 1
    %12 = vsyncpa %s11, 0
    %13 = vsyncpa [#allocation6], 0
    %s14 = scalar_lea.sflag [#allocation6], 1
    %15 = vsyncpa %s14, 0
    loop: start=0, step=1, limit=4
    $region2: #{tpu_custom_call.1} parent=1 // loop_pre_header
      _
    $region3: #{tpu_custom_call.1} parent=1 // loop_header
      %s17 = sphi 0, %s21
      %p18 = scmp.ge.s32.totalorder %s17, 4
      %s24 = sphi 0, %s36
      %s25 = sphi 0, %s32
      %s26 = sphi 0, %s24
      %s27 = sphi 0, %s25
      %s28 = sphi 0, %s26
      %s29 = sphi 0, %s27
      %s45 = sphi 0, %s47
      %s48 = sphi 0, %s45
      %s49 = sphi 0, %s48
      %s65 = sphi 0, %s49
      %s77 = sphi 0, %s79
      %s80 = sphi 0, %s77
      %s81 = sphi 0, %s80
      %s97 = sphi 0, %s81
      %s103 = sphi 0, %s105
      %s106 = sphi 0, %s103
      %s107 = sphi 0, %s106
      %s123 = sphi 0, %s107
    $region4: #{tpu_custom_call.1} parent=1 // loop_header_branch
      %20 = sbr.rel (%p18) target = $region8
    $region5: #{tpu_custom_call.1} parent=1 // loop_body
      %s22 = ssub.s32 %s17, 1
      %s23 = ssub.s32 %s17, 2
      %s30 = sadd.s32 1, %s25
      %p31 = scmp.ge.s32.totalorder %s30, 1
      %s32 = scalar_select %p31, 0, %s30
      %s33 = sadd.s32 1, %s24
      %s34 = scalar_select %p31, %s33, %s24
      %p35 = scmp.ge.s32.totalorder %s34, 2
      %s36 = scalar_select %p35, 0, %s34
      %s37 = sadd.s32 %s24, %s25
      %p38 = scmp.lt.s32.totalorder %s37, 0
      %s39 = scalar_select %p38, %s37, 0
      %s40 = sadd.s32 %s36, %s32
      %p41 = scmp.lt.s32.totalorder %s40, 0
      %s42 = scalar_select %p41, %s40, 0
      %s43 = ssub.s32 %s39, %s42
      %p44 = scmp.eq.s32.totalorder %s43, 0
      %s46 = sadd.s32 %s45, 1
      %s47 = scalar_select %p44, %s45, %s46
      %p50 = pneg %p44
      %p51 = scmp.eq.s32.totalorder %s17, 1
      %p52 = por %p50, %p51
      %p53 = scmp.ne.s32.totalorder %s45, %s48
      %p54 = scmp.eq.s32.totalorder %s17, 0
      %p55 = por %p53, %p54
      %p56 = scmp.ne.s32.totalorder %s45, %s48
      %p57 = scmp.eq.s32.totalorder %s22, 1
      %p58 = por %p56, %p57
      %p59 = scmp.ne.s32.totalorder %s48, %s49
      %p60 = scmp.eq.s32.totalorder %s22, 0
      %p61 = por %p59, %p60
      %p62 = scmp.ne.s32.totalorder %s48, %s49
      %p63 = scmp.eq.s32.totalorder %s23, 1
      %p64 = por %p62, %p63
      %p66 = scmp.ne.s32.totalorder %s49, %s65
      %p67 = scmp.eq.s32.totalorder %s23, 0
      %p68 = por %p66, %p67
      %s69 = sadd.s32 %s24, %s25
      %p70 = scmp.lt.s32.totalorder %s69, 0
      %s71 = scalar_select %p70, %s69, 0
      %s72 = sadd.s32 %s36, %s32
      %p73 = scmp.lt.s32.totalorder %s72, 0
      %s74 = scalar_select %p73, %s72, 0
      %s75 = ssub.s32 %s71, %s74
      %p76 = scmp.eq.s32.totalorder %s75, 0
      %s78 = sadd.s32 %s77, 1
      %s79 = scalar_select %p76, %s77, %s78
      %p82 = pneg %p76
      %p83 = scmp.eq.s32.totalorder %s17, 1
      %p84 = por %p82, %p83
      %p85 = scmp.ne.s32.totalorder %s77, %s80
      %p86 = scmp.eq.s32.totalorder %s17, 0
      %p87 = por %p85, %p86
      %p88 = scmp.ne.s32.totalorder %s77, %s80
      %p89 = scmp.eq.s32.totalorder %s22, 1
      %p90 = por %p88, %p89
      %p91 = scmp.ne.s32.totalorder %s80, %s81
      %p92 = scmp.eq.s32.totalorder %s22, 0
      %p93 = por %p91, %p92
      %p94 = scmp.ne.s32.totalorder %s80, %s81
      %p95 = scmp.eq.s32.totalorder %s23, 1
      %p96 = por %p94, %p95
      %p98 = scmp.ne.s32.totalorder %s81, %s97
      %p99 = scmp.eq.s32.totalorder %s23, 0
      %p100 = por %p98, %p99
      %s101 = ssub.s32 %s24, %s36
      %p102 = scmp.eq.s32.totalorder %s101, 0
      %s104 = sadd.s32 %s103, 1
      %s105 = scalar_select %p102, %s103, %s104
      %p108 = pneg %p102
      %p109 = scmp.eq.s32.totalorder %s17, 1
      %p110 = por %p108, %p109
      %p111 = scmp.ne.s32.totalorder %s103, %s106
      %p112 = scmp.eq.s32.totalorder %s17, 0
      %p113 = por %p111, %p112
      %p114 = scmp.ne.s32.totalorder %s103, %s106
      %p115 = scmp.eq.s32.totalorder %s22, 1
      %p116 = por %p114, %p115
      %p117 = scmp.ne.s32.totalorder %s106, %s107
      %p118 = scmp.eq.s32.totalorder %s22, 0
      %p119 = por %p117, %p118
      %p120 = scmp.ne.s32.totalorder %s106, %s107
      %p121 = scmp.eq.s32.totalorder %s23, 1
      %p122 = por %p120, %p121
      %p124 = scmp.ne.s32.totalorder %s107, %s123
      %p125 = scmp.eq.s32.totalorder %s23, 0
      %p126 = por %p124, %p125
      %p127 = scmp.le.s32.totalorder 1, %s17
      %p128 = scmp.lt.s32.totalorder %s17, 3
      %p129 = pnand %p127, %p128
      %p130 = pneg %p129
      // Predicated region
      $region9: #{tpu_custom_call.1} parent=5 // pred_check
        _
      $region10: #{tpu_custom_call.1} parent=5 // pred_check_branch
        %132 = sbr.rel (%p129) target = $region12
      $region11: #{tpu_custom_call.1} parent=5 // pred_region
        %s133 = ssub.s32 %s17, 1
      $region12: #{tpu_custom_call.1} parent=5 // pred_fallthru
        _
      %p134 = scmp.lt.s32.totalorder %s17, 2
      // Predicated region
      $region13: #{tpu_custom_call.1} parent=5 // pred_check
        %p135 = pneg %p134
      $region14: #{tpu_custom_call.1} parent=5 // pred_check_branch
        %137 = sbr.rel (%p135) target = $region16
      $region15: #{tpu_custom_call.1} parent=5 // pred_region
        // Predicated region
        $region17: #{tpu_custom_call.1} parent=15 // pred_check
          %p138 = pneg %p55
        $region18: #{tpu_custom_call.1} parent=15 // pred_check_branch
          %140 = sbr.rel (%p138) target = $region20
        $region19: #{tpu_custom_call.1} parent=15 // pred_region
          %s141 = sand.u32 %s45, 1
          %s142 = scalar_lea.sflag [#allocation5], %s141
          %s143 = sand.u32 %s45, 1
          %s144 = smul.addr %s143, 16
          %s145 = scalar_lea.vmem [#allocation4], %s144
          %s146 = sadd.s32 %s24, %s25
          %p147 = scmp.lt.s32.totalorder %s146, 0
          %s148 = scalar_select %p147, %s146, 0
          %150 = vsyncadd %s142, 0
          %s151 = smul.addr %s148, 2
          %s152 = smul.addr %s151, 8
          %s153 = scalar_lea.hbm %s0, %s152
          %s155 = sshll.u32 %s153, 4
          %s156 = int_to_ptr.hbm [resolvable:$true] %s155
          %s157 = sshll.u32 %s145, 4
          %s158 = int_to_ptr.vmem [resolvable:$true] %s157
          %160 = dma.hbm_to_vmem [thread:$0]  %s156, 256, %s158, %s142
        $region20: #{tpu_custom_call.1} parent=15 // pred_fallthru
          _
        // Predicated region
        $region21: #{tpu_custom_call.1} parent=15 // pred_check
          %p161 = pneg %p87
        $region22: #{tpu_custom_call.1} parent=15 // pred_check_branch
          %163 = sbr.rel (%p161) target = $region24
        $region23: #{tpu_custom_call.1} parent=15 // pred_region
          %s164 = sand.u32 %s77, 1
          %s165 = scalar_lea.sflag [#allocation8], %s164
          %s166 = sand.u32 %s77, 1
          %s167 = smul.addr %s166, 16
          %s168 = scalar_lea.vmem [#allocation7], %s167
          %s169 = sadd.s32 %s24, %s25
          %p170 = scmp.lt.s32.totalorder %s169, 0
          %s171 = scalar_select %p170, %s169, 0
          %173 = vsyncadd %s165, 0
          %s174 = smul.addr %s171, 2
          %s175 = smul.addr %s174, 8
          %s176 = scalar_lea.hbm %s1, %s175
          %s178 = sshll.u32 %s176, 4
          %s179 = int_to_ptr.hbm [resolvable:$true] %s178
          %s180 = sshll.u32 %s168, 4
          %s181 = int_to_ptr.vmem [resolvable:$true] %s180
          %183 = dma.hbm_to_vmem [thread:$0]  %s179, 256, %s181, %s165
        $region24: #{tpu_custom_call.1} parent=15 // pred_fallthru
          _
      $region16: #{tpu_custom_call.1} parent=5 // pred_fallthru
        _
      %p184 = scmp.le.s32.totalorder 1, %s17
      %p185 = scmp.lt.s32.totalorder %s17, 3
      %p186 = pnand %p184, %p185
      %p187 = pneg %p186
      // Predicated region
      $region25: #{tpu_custom_call.1} parent=5 // pred_check
        _
      $region26: #{tpu_custom_call.1} parent=5 // pred_check_branch
        %189 = sbr.rel (%p186) target = $region28
      $region27: #{tpu_custom_call.1} parent=5 // pred_region
        %s190 = ssub.s32 %s17, 1
        %s191 = sand.u32 %s48, 1
        %s192 = scalar_lea.sflag [#allocation5], %s191
        %s193 = sand.u32 %s48, 1
        %s194 = smul.addr %s193, 16
        %s195 = scalar_lea.vmem [#allocation4], %s194
        // Predicated region
        $region29: #{tpu_custom_call.1} parent=27 // pred_check
          %p196 = pneg %p61
        $region30: #{tpu_custom_call.1} parent=27 // pred_check_branch
          %198 = sbr.rel (%p196) target = $region32
        $region31: #{tpu_custom_call.1} parent=27 // pred_region
          %200 = dma.done %s192, 256
        $region32: #{tpu_custom_call.1} parent=27 // pred_fallthru
          _
        %s201 = sand.u32 %s80, 1
        %s202 = scalar_lea.sflag [#allocation8], %s201
        %s203 = sand.u32 %s80, 1
        %s204 = smul.addr %s203, 16
        %s205 = scalar_lea.vmem [#allocation7], %s204
        // Predicated region
        $region33: #{tpu_custom_call.1} parent=27 // pred_check
          %p206 = pneg %p93
        $region34: #{tpu_custom_call.1} parent=27 // pred_check_branch
          %208 = sbr.rel (%p206) target = $region36
        $region35: #{tpu_custom_call.1} parent=27 // pred_region
          %210 = dma.done %s202, 256
        $region36: #{tpu_custom_call.1} parent=27 // pred_fallthru
          _
        %s211 = sand.u32 %s48, 1
        %s212 = scalar_lea.sflag [#allocation5], %s211
        %s213 = sand.u32 %s48, 1
        %s214 = smul.addr %s213, 16
        %s215 = scalar_lea.vmem [#allocation4], %s214
        %p216 = pneg %p61
        %p217 = pneg %p58
        %s218 = sand.u32 %s80, 1
        %s219 = scalar_lea.sflag [#allocation8], %s218
        %s220 = sand.u32 %s80, 1
        %s221 = smul.addr %s220, 16
        %s222 = scalar_lea.vmem [#allocation7], %s221
        %p223 = pneg %p93
        %p224 = pneg %p90
        %p225 = pneg %p119
        %p226 = pneg %p116
        %s227 = sand.u32 %s106, 1
        %s228 = scalar_lea.sflag [#allocation6], %s227
        %s229 = sand.u32 %s106, 1
        %s230 = smul.addr %s229, 8
        %s231 = scalar_lea.vmem [#allocation9], %s230
        %s232 = sadd.s32 %s26, %s27
        %p233 = scmp.lt.s32.totalorder %s232, 0
        %s234 = scalar_select %p233, %s232, 0
        %s235 = sadd.s32 %s26, %s27
        %p236 = scmp.lt.s32.totalorder %s235, 0
        %s237 = scalar_select %p236, %s235, 0
        %p238 = scmp.eq.s32.totalorder %s27, 0
        // Predicated region
        $region37: #{tpu_custom_call.1} parent=27 // pred_check
          %p239 = pneg %p238
        $region38: #{tpu_custom_call.1} parent=27 // pred_check_branch
          %241 = sbr.rel (%p239) target = $region40
        $region39: #{tpu_custom_call.1} parent=27 // pred_region
          %v242 = vlaneseq
          %vm243 = vcmp.ge.s32.totalorder %v242, 0
          %vm244 = vcmp.lt.s32.totalorder %v242, 256
          %vm245 = vmand %vm243, %vm244
          %246 = vst.msk [vmem:[#allocation2] sm:$0x3] %vm245, 0.0
          %247 = vst.msk [vmem:[#allocation3] sm:$0x3] %vm245, 0.0
        $region40: #{tpu_custom_call.1} parent=27 // pred_fallthru
          _
        %v248 = vld [vmem:[%s195] sm:$0x1f]
        %v249 = vld [vmem:[%s195 + $0x8] sm:$0x1f]
        %v250 = vld [vmem:[%s205] sm:$0x1f]
        %v251 = vld [vmem:[%s205 + $0x8] sm:$0x1f]
        %v252 = vsub.f32 %v250, %v248
        %v253 = vsub.f32 %v251, %v249
        %v254 = vmul.f32 %v252, %v252
        %v255 = vmul.f32 %v253, %v253
        %v256 = vmul.f32 %v250, %v250
        %v257 = vmul.f32 %v251, %v251
        %s258 = sadd.s32 %s26, %s27
        %p259 = scmp.lt.s32.totalorder %s258, 0
        // Predicated region
        $region41: #{tpu_custom_call.1} parent=27 // pred_check
          %p260 = pneg %p259
        $region42: #{tpu_custom_call.1} parent=27 // pred_check_branch
          %262 = sbr.rel (%p260) target = $region44
        $region43: #{tpu_custom_call.1} parent=27 // pred_region
          %v263 = vld [vmem:[#allocation2] sm:$0x3]
          %vm264 = vcmask 1044480
          %v265 = vsel %vm264, %v254, 0.0
          %v266 = vrot.slane %v265, 4
          %v267 = vadd.f32 %v265, %v266
          %v268 = vrot.slane %v267, 2
          %v269 = vadd.f32 %v267, %v268
          %v270 = vrot.slane %v269, 1
          %v271 = vadd.f32 %v269, %v270
          %v272 = vsel %vm264, %v255, 0.0
          %v273 = vrot.slane %v272, 4
          %v274 = vadd.f32 %v272, %v273
          %v275 = vrot.slane %v274, 2
          %v276 = vadd.f32 %v274, %v275
          %v277 = vrot.slane %v276, 1
          %v278 = vadd.f32 %v276, %v277
          %v281 = vrot.slane %v278, 7
          %vm282 = vcmask 1040384
          %v283 = vsel %vm282, %v271, %v281
          %v285 = vadd.f32 %v263, %v283
          %v286 = vlaneseq
          %vm287 = vcmp.ge.s32.totalorder %v286, 0
          %vm288 = vcmp.lt.s32.totalorder %v286, 256
          %vm289 = vmand %vm287, %vm288
          %290 = vst.msk [vmem:[#allocation2] sm:$0x3] %vm289, %v285
          %v291 = vld [vmem:[#allocation3] sm:$0x3]
          %v292 = vsel %vm264, %v256, 0.0
          %v293 = vrot.slane %v292, 4
          %v294 = vadd.f32 %v292, %v293
          %v295 = vrot.slane %v294, 2
          %v296 = vadd.f32 %v294, %v295
          %v297 = vrot.slane %v296, 1
          %v298 = vadd.f32 %v296, %v297
          %v299 = vsel %vm264, %v257, 0.0
          %v300 = vrot.slane %v299, 4
          %v301 = vadd.f32 %v299, %v300
          %v302 = vrot.slane %v301, 2
          %v303 = vadd.f32 %v301, %v302
          %v304 = vrot.slane %v303, 1
          %v305 = vadd.f32 %v303, %v304
          %v308 = vrot.slane %v305, 7
          %v309 = vsel %vm282, %v298, %v308
          %v311 = vadd.f32 %v291, %v309
          %312 = vst.msk [vmem:[#allocation3] sm:$0x3] %vm289, %v311
        $region44: #{tpu_custom_call.1} parent=27 // pred_fallthru
          _
        %p313 = scmp.ge.s32.totalorder %s258, 0
        // Predicated region
        $region45: #{tpu_custom_call.1} parent=27 // pred_check
          %p314 = pneg %p313
        $region46: #{tpu_custom_call.1} parent=27 // pred_check_branch
          %316 = sbr.rel (%p314) target = $region48
        $region47: #{tpu_custom_call.1} parent=27 // pred_region
          %s317 = smul.u32 %s258, 5
          %v318 = vlaneseq
          %v319 = vshrl.u32 %v318, 7
          %v320 = vstv %s317
          %v321 = vadd.s32 %v319, %v320
          %vm322 = vcmp.lt.s32.totalorder %v321, 5
          %v323 = vsel %vm322, %v254, 0.0
          %v324 = vsel %vm322, %v255, 0.0
          %v325 = vsel %vm322, %v256, 0.0
          %v326 = vsel %vm322, %v257, 0.0
          %v327 = vld [vmem:[#allocation2] sm:$0x3]
          %vm328 = vcmask 1044480
          %v329 = vsel %vm328, %v323, 0.0
          %v330 = vrot.slane %v329, 4
          %v331 = vadd.f32 %v329, %v330
          %v332 = vrot.slane %v331, 2
          %v333 = vadd.f32 %v331, %v332
          %v334 = vrot.slane %v333, 1
          %v335 = vadd.f32 %v333, %v334
          %v336 = vsel %vm328, %v324, 0.0
          %v337 = vrot.slane %v336, 4
          %v338 = vadd.f32 %v336, %v337
          %v339 = vrot.slane %v338, 2
          %v340 = vadd.f32 %v338, %v339
          %v341 = vrot.slane %v340, 1
          %v342 = vadd.f32 %v340, %v341
          %v345 = vrot.slane %v342, 7
          %vm346 = vcmask 1040384
          %v347 = vsel %vm346, %v335, %v345
          %v349 = vadd.f32 %v327, %v347
          %v350 = vlaneseq
          %vm351 = vcmp.ge.s32.totalorder %v350, 0
          %vm352 = vcmp.lt.s32.totalorder %v350, 256
          %vm353 = vmand %vm351, %vm352
          %354 = vst.msk [vmem:[#allocation2] sm:$0x3] %vm353, %v349
          %v355 = vld [vmem:[#allocation3] sm:$0x3]
          %v356 = vsel %vm328, %v325, 0.0
          %v357 = vrot.slane %v356, 4
          %v358 = vadd.f32 %v356, %v357
          %v359 = vrot.slane %v358, 2
          %v360 = vadd.f32 %v358, %v359
          %v361 = vrot.slane %v360, 1
          %v362 = vadd.f32 %v360, %v361
          %v363 = vsel %vm328, %v326, 0.0
          %v364 = vrot.slane %v363, 4
          %v365 = vadd.f32 %v363, %v364
          %v366 = vrot.slane %v365, 2
          %v367 = vadd.f32 %v365, %v366
          %v368 = vrot.slane %v367, 1
          %v369 = vadd.f32 %v367, %v368
          %v372 = vrot.slane %v369, 7
          %v373 = vsel %vm346, %v362, %v372
          %v375 = vadd.f32 %v355, %v373
          %376 = vst.msk [vmem:[#allocation3] sm:$0x3] %vm353, %v375
        $region48: #{tpu_custom_call.1} parent=27 // pred_fallthru
          _
        // Predicated region
        $region49: #{tpu_custom_call.1} parent=27 // pred_check
          %p377 = pneg %p238
        $region50: #{tpu_custom_call.1} parent=27 // pred_check_branch
          %379 = sbr.rel (%p377) target = $region52
        $region51: #{tpu_custom_call.1} parent=27 // pred_region
          %v380 = vld [vmem:[#allocation2] sm:$0x3]
          %v382 = vperm.slane %v380, 0
          %v383 = vperm.slane %v380, 1
          %vm386 = vcmask 1040384
          %v387 = vsel %vm386, %v382, 0.0
          %v388 = vsel %vm386, %v383, 0.0
          %v389 = vadd.f32 %v387, %v388
          %390 = vadd.xlane.f32.xlu0 %v389
          %v391 = vpop.xlane.xlu0 %390
          %v392 = vrot.slane %v391, 4
          %v393 = vadd.f32 %v391, %v392
          %v394 = vrot.slane %v393, 2
          %v395 = vadd.f32 %v393, %v394
          %v396 = vrot.slane %v395, 1
          %v397 = vadd.f32 %v395, %v396
          %s398 = vtos %v397
          %v399 = vld [vmem:[#allocation3] sm:$0x3]
          %v401 = vperm.slane %v399, 0
          %v402 = vperm.slane %v399, 1
          %v405 = vsel %vm386, %v401, 0.0
          %v406 = vsel %vm386, %v402, 0.0
          %v407 = vadd.f32 %v405, %v406
          %408 = vadd.xlane.f32.xlu0 %v407
          %v409 = vpop.xlane.xlu0 %408
          %v410 = vrot.slane %v409, 4
          %v411 = vadd.f32 %v409, %v410
          %v412 = vrot.slane %v411, 2
          %v413 = vadd.f32 %v411, %v412
          %v414 = vrot.slane %v413, 1
          %v415 = vadd.f32 %v413, %v414
          %s416 = vtos %v415
          %v417 = vlaneseq
          %v418 = vshrl.u32 %v417, 7
          %vm419 = vcmp.eq.s32.totalorder %v418, 0
          %vm420 = vcmp.eq.s32.totalorder %v418, 1
          %v421 = vstv %s416
          %v422 = vsel %vm420, %v421, 0.0
          %v423 = vstv %s398
          %v424 = vsel %vm419, %v423, %v422
          %425 = vst [vmem:[%s231] sm:$0xff] %v424
        $region52: #{tpu_custom_call.1} parent=27 // pred_fallthru
          _
        %s426 = sand.u32 %s106, 1
        %s427 = scalar_lea.sflag [#allocation6], %s426
        %s428 = sand.u32 %s106, 1
        %s429 = smul.addr %s428, 8
        %s430 = scalar_lea.vmem [#allocation9], %s429
        // Predicated region
        $region53: #{tpu_custom_call.1} parent=27 // pred_check
          %p431 = pneg %p116
        $region54: #{tpu_custom_call.1} parent=27 // pred_check_branch
          %433 = sbr.rel (%p431) target = $region56
        $region55: #{tpu_custom_call.1} parent=27 // pred_region
          %435 = vsyncadd %s427, 0
          %s436 = smul.addr %s26, 8
          %s437 = scalar_lea.hbm %s2, %s436
          %s439 = sshll.u32 %s430, 4
          %s440 = int_to_ptr.vmem [resolvable:$true] %s439
          %s441 = sshll.u32 %s437, 4
          %s442 = int_to_ptr.hbm [resolvable:$true] %s441
          %444 = dma.vmem_to_hbm [thread:$0]  %s440, 128, %s442, %s427
        $region56: #{tpu_custom_call.1} parent=27 // pred_fallthru
          _
      $region28: #{tpu_custom_call.1} parent=5 // pred_fallthru
        _
      %p445 = scmp.le.s32.totalorder 2, %s17
      // Predicated region
      $region57: #{tpu_custom_call.1} parent=5 // pred_check
        %p446 = pneg %p445
      $region58: #{tpu_custom_call.1} parent=5 // pred_check_branch
        %448 = sbr.rel (%p446) target = $region60
      $region59: #{tpu_custom_call.1} parent=5 // pred_region
        %s449 = ssub.s32 %s17, 2
        // Predicated region
        $region61: #{tpu_custom_call.1} parent=59 // pred_check
          %p450 = pneg %p122
        $region62: #{tpu_custom_call.1} parent=59 // pred_check_branch
          %452 = sbr.rel (%p450) target = $region64
        $region63: #{tpu_custom_call.1} parent=59 // pred_region
          %s453 = sand.u32 %s107, 1
          %s454 = scalar_lea.sflag [#allocation6], %s453
          %s455 = sand.u32 %s107, 1
          %s456 = smul.addr %s455, 8
          %s457 = scalar_lea.vmem [#allocation9], %s456
          %459 = dma.done %s454, 128
        $region64: #{tpu_custom_call.1} parent=59 // pred_fallthru
          _
      $region60: #{tpu_custom_call.1} parent=5 // pred_fallthru
        _
    $region6: #{tpu_custom_call.1} parent=1 // loop_footer
      %s21 = sadd.s32 1, %s17
    $region7: #{tpu_custom_call.1} parent=1 // loop_footer_branch
      %16 = sbr.rel target = $region3
    $region8: #{tpu_custom_call.1} parent=1 // loop_exit
      _
    %460 = vsyncpa [#allocation5], 1
    %s461 = scalar_lea.sflag [#allocation5], 1
    %462 = vsyncpa %s461, 1
    %463 = vsyncpa [#allocation8], 1
    %s464 = scalar_lea.sflag [#allocation8], 1
    %465 = vsyncpa %s464, 1
    %466 = vsyncpa [#allocation6], 1
    %s467 = scalar_lea.sflag [#allocation6], 1
    %468 = vsyncpa %s467, 1

</llo_original>
